<compile_context>
chip_gen: v5e
topology: v5e:2x2
jax: 0.10.0
libtpu: 0.0.40
codegen_flags: <defaults>
</compile_context>

<pallas_src>
import math
import functools

import jax
import jax.numpy as jnp
from jax.experimental import pallas as pl
from jax.experimental.pallas import tpu as pltpu

INPUT_DIM = 1
HIDDEN_DIMS = [64, 64]
OUTPUT_DIM = 1

DEFAULT_TILE = 8192   # batch samples (lanes) per grid step; multiple of 128
LANE = 128            # lane width / padding granularity
SUBLANE = 8           # f32 sublanes per vreg


def fcn_kernel(x_ref, w1_ref, b1_ref, w2_ref, b2_ref, w3_ref, b3_ref, o_ref,
               *, bf16_matmul):
    # x_ref: (1, TILE) -- batch on lanes
    # w1_ref, b1_ref, b2_ref, w3_ref: (64, 1); w2_ref: (64, 64); b3_ref: (1,) in SMEM
    x = x_ref[...]                                            # (1, TILE)

    # Layer 1: Linear(1 -> 64) + ReLU.  K == 1, so skip the MXU and do a VPU
    # broadcast outer product instead.
    h1 = jnp.maximum(w1_ref[...] * x + b1_ref[...], 0.0)      # (64, TILE) f32

    # Layer 2: Linear(64 -> 64) + ReLU on the MXU; batch tile is the lane dim.
    if bf16_matmul:
        # Fewer MXU passes (v6e/v7x); accumulate stays f32.  Elementwise math
        # stays f32 everywhere (v5e VPU/EUP has no bf16).
        h2 = jnp.dot(w2_ref[...].astype(jnp.bfloat16), h1.astype(jnp.bfloat16),
                     preferred_element_type=jnp.float32)
    else:
        h2 = jnp.dot(w2_ref[...], h1, preferred_element_type=jnp.float32)
    h2 = jnp.maximum(h2 + b2_ref[...], 0.0)                   # (64, TILE) f32

    # Layer 3: Linear(64 -> 1): multiply, then reduce the 64 sublane rows.
    # Explicitly: 7 full-vreg VALU adds over the eight 8-sublane slabs
    # (vreg-aligned slices, no relayout), then one intra-vreg sublane reduce
    # (XLU) to produce the (1, TILE) lane-dense result.
    prod = h2 * w3_ref[...]                                   # (64, TILE)
    partial = prod[0:SUBLANE, :]
    for r in range(1, 64 // SUBLANE):
        partial = partial + prod[r * SUBLANE:(r + 1) * SUBLANE, :]
    out = jnp.sum(partial, axis=0, keepdims=True)             # (1, TILE)
    o_ref[...] = (out + b3_ref[0]).astype(o_ref.dtype)


@functools.partial(jax.jit, static_argnames=("max_tile", "bf16_matmul"))
def fcn_forward(x, params, max_tile=DEFAULT_TILE, bf16_matmul=False):
    """x: (N, 1) float32 -> (N, 1) float32."""
    n = x.shape[0]
    # Pad only to the next lane multiple (<=127 elems) -- no full-array copy.
    n_pad = ((n + LANE - 1) // LANE) * LANE
    x_flat = x.reshape(-1)
    if n_pad != n:
        x_flat = jnp.pad(x_flat, (0, n_pad - n))
    x2d = x_flat.reshape(1, n_pad)  # batch on lanes -> lane-dense I/O

    tile = min(max_tile, n_pad)            # multiple of 128 by construction
    grid = (pl.cdiv(n_pad, tile),)         # ragged last block clipped by Pallas

    h = HIDDEN_DIMS[0]
    flops = n_pad * (2 * h * h + 4 * h)                 # L2 matmul + L1/L3 mul-add
    bytes_accessed = 8 * n_pad + 4 * (3 * h + h * h + h + 1)

    kernel = functools.partial(fcn_kernel, bf16_matmul=bf16_matmul)

    out2d = pl.pallas_call(
        kernel,
        out_shape=jax.ShapeDtypeStruct((1, n_pad), jnp.float32),
        grid=grid,
        in_specs=[
            pl.BlockSpec((1, tile), lambda i: (0, i)),           # x (streamed)
            pl.BlockSpec((h, 1), lambda i: (0, 0)),              # w1 (resident)
            pl.BlockSpec((h, 1), lambda i: (0, 0)),              # b1
            pl.BlockSpec((h, h), lambda i: (0, 0)),              # w2
            pl.BlockSpec((h, 1), lambda i: (0, 0)),              # b2
            pl.BlockSpec((h, 1), lambda i: (0, 0)),              # w3
            pl.BlockSpec(memory_space=pltpu.MemorySpace.SMEM),   # b3 scalar
        ],
        out_specs=pl.BlockSpec((1, tile), lambda i: (0, i)),
        compiler_params=pltpu.CompilerParams(
            dimension_semantics=(pltpu.PARALLEL,),   # shard batch tiles (v7x 2-TC)
            vmem_limit_bytes=32 << 20,               # covers v5e's 16 MiB default
        ),
        cost_estimate=pl.CostEstimate(
            flops=flops, transcendentals=0, bytes_accessed=bytes_accessed),
    )(x2d, params["w1"], params["b1"], params["w2"], params["b2"],
      params["w3"], params["b3"])

    return out2d.reshape(n_pad, 1)[:n]


def init_params(key):
    """PyTorch-equivalent init U(-1/sqrt(fan_in), 1/sqrt(fan_in)), stored in the
    kernel's layout:
      w1, b1 : (64, 1)  (== PyTorch weight (out=64, in=1), bias as a column)
      w2     : (64, 64) (PyTorch (out, in) orientation; kernel does W2 @ h1)
      b2     : (64, 1)
      w3     : (64, 1)  (== PyTorch weight (1, 64) transposed)
      b3     : (1,)
    """
    h = HIDDEN_DIMS[0]
    params = {}

    key, k = jax.random.split(key)
    kw, kb = jax.random.split(k)
    bound = 1.0 / math.sqrt(INPUT_DIM)
    params["w1"] = jax.random.uniform(kw, (h, 1), jnp.float32, -bound, bound)
    params["b1"] = jax.random.uniform(kb, (h, 1), jnp.float32, -bound, bound)

    key, k = jax.random.split(key)
    kw, kb = jax.random.split(k)
    bound = 1.0 / math.sqrt(h)
    params["w2"] = jax.random.uniform(kw, (h, h), jnp.float32, -bound, bound)
    params["b2"] = jax.random.uniform(kb, (h, 1), jnp.float32, -bound, bound)

    key, k = jax.random.split(key)
    kw, kb = jax.random.split(k)
    bound = 1.0 / math.sqrt(h)
    params["w3"] = jax.random.uniform(kw, (h, 1), jnp.float32, -bound, bound)
    params["b3"] = jax.random.uniform(kb, (1,), jnp.float32, -bound, bound)
    return params


def fcn_reference(x, params):
    """Pure-JAX reference in the standard (batch, features) layout."""
    h1 = jnp.maximum(x @ params["w1"].T + params["b1"].T, 0.0)   # (N, 64)
    h2 = jnp.maximum(h1 @ params["w2"].T + params["b2"].T, 0.0)  # (N, 64)
    return h2 @ params["w3"] + params["b3"]                      # (N, 1)


if __name__ == "__main__":
    key = jax.random.PRNGKey(0)
    key, kx = jax.random.split(key)
    params = init_params(key)

    batch = 8
    x = jax.random.normal(kx, (batch, INPUT_DIM), jnp.float32)

    out = jax.block_until_ready(fcn_forward(x, params))
    ref = fcn_reference(x, params)

    assert out.shape == (batch, OUTPUT_DIM), out.shape
    assert jnp.allclose(out, ref, atol=1e-5, rtol=1e-5), float(
        jnp.max(jnp.abs(out - ref)))

    print("KERNEL_OK")
</pallas_src>

<mosaic_0001>
module attributes {stable_mosaic.version = 11 : i64} {
  func.func @fcn_kernel(%arg0: i32, %arg1: memref<1x128xf32, #tpu.memory_space<vmem>>, %arg2: memref<64x1xf32, #tpu.memory_space<vmem>>, %arg3: memref<64x1xf32, #tpu.memory_space<vmem>>, %arg4: memref<64x64xf32, #tpu.memory_space<vmem>>, %arg5: memref<64x1xf32, #tpu.memory_space<vmem>>, %arg6: memref<64x1xf32, #tpu.memory_space<vmem>>, %arg7: memref<1xf32, #tpu.memory_space<smem>>, %arg8: memref<1x128xf32, #tpu.memory_space<vmem>>) attributes {dimension_semantics = [#tpu.dimension_semantics<parallel>], iteration_bounds = array<i64: 1>, scalar_prefetch = 0 : i64, scratch_operands = 0 : i64, tpu.core_type = #tpu.core_type<tc>, window_params = [{transform_indices = @transform_0, window_bounds = array<i64: 1, 128>}, {pipeline_mode = #tpu.pipeline_mode<synchronous>, transform_indices = @transform_1, window_bounds = array<i64: 64, 1>}, {pipeline_mode = #tpu.pipeline_mode<synchronous>, transform_indices = @transform_2, window_bounds = array<i64: 64, 1>}, {pipeline_mode = #tpu.pipeline_mode<synchronous>, transform_indices = @transform_3, window_bounds = array<i64: 64, 64>}, {pipeline_mode = #tpu.pipeline_mode<synchronous>, transform_indices = @transform_4, window_bounds = array<i64: 64, 1>}, {pipeline_mode = #tpu.pipeline_mode<synchronous>, transform_indices = @transform_5, window_bounds = array<i64: 64, 1>}, {transform_indices = @transform_6, window_bounds = array<i64: 1>}, {transform_indices = @transform_7, window_bounds = array<i64: 1, 128>}]} {
    %c0 = arith.constant 0 : index
    %c0_0 = arith.constant 0 : index
    %0 = vector.load %arg1[%c0, %c0_0] : memref<1x128xf32, #tpu.memory_space<vmem>>, vector<1x128xf32>
    %c0_1 = arith.constant 0 : index
    %c0_2 = arith.constant 0 : index
    %1 = vector.load %arg2[%c0_1, %c0_2] : memref<64x1xf32, #tpu.memory_space<vmem>>, vector<64x1xf32>
    %2 = vector.broadcast %1 : vector<64x1xf32> to vector<64x128xf32>
    %3 = vector.broadcast %0 : vector<1x128xf32> to vector<64x128xf32>
    %4 = arith.mulf %2, %3 : vector<64x128xf32>
    %c0_3 = arith.constant 0 : index
    %c0_4 = arith.constant 0 : index
    %5 = vector.load %arg3[%c0_3, %c0_4] : memref<64x1xf32, #tpu.memory_space<vmem>>, vector<64x1xf32>
    %6 = vector.broadcast %5 : vector<64x1xf32> to vector<64x128xf32>
    %7 = arith.addf %4, %6 : vector<64x128xf32>
    %cst = arith.constant 0.000000e+00 : f32
    %8 = vector.broadcast %cst : f32 to vector<64x128xf32>
    %9 = arith.maximumf %7, %8 : vector<64x128xf32>
    %c0_5 = arith.constant 0 : index
    %c0_6 = arith.constant 0 : index
    %10 = vector.load %arg4[%c0_5, %c0_6] : memref<64x64xf32, #tpu.memory_space<vmem>>, vector<64x64xf32>
    %cst_7 = arith.constant dense<0.000000e+00> : vector<64x128xf32>
    %11 = tpu.matmul %10, %9, %cst_7 {dimension_numbers = #tpu.dot_dimension_numbers<[1], [0], [0], [1], [0, 0, 1, 1], [], []>} : vector<64x64xf32>, vector<64x128xf32>, vector<64x128xf32> -> vector<64x128xf32>
    %c0_8 = arith.constant 0 : index
    %c0_9 = arith.constant 0 : index
    %12 = vector.load %arg5[%c0_8, %c0_9] : memref<64x1xf32, #tpu.memory_space<vmem>>, vector<64x1xf32>
    %13 = vector.broadcast %12 : vector<64x1xf32> to vector<64x128xf32>
    %14 = arith.addf %11, %13 : vector<64x128xf32>
    %cst_10 = arith.constant 0.000000e+00 : f32
    %15 = vector.broadcast %cst_10 : f32 to vector<64x128xf32>
    %16 = arith.maximumf %14, %15 : vector<64x128xf32>
    %c0_11 = arith.constant 0 : index
    %c0_12 = arith.constant 0 : index
    %17 = vector.load %arg6[%c0_11, %c0_12] : memref<64x1xf32, #tpu.memory_space<vmem>>, vector<64x1xf32>
    %18 = vector.broadcast %17 : vector<64x1xf32> to vector<64x128xf32>
    %19 = arith.mulf %16, %18 : vector<64x128xf32>
    %20 = vector.extract_strided_slice %19 {offsets = [0, 0], sizes = [8, 128], strides = [1, 1]} : vector<64x128xf32> to vector<8x128xf32>
    %21 = vector.extract_strided_slice %19 {offsets = [8, 0], sizes = [8, 128], strides = [1, 1]} : vector<64x128xf32> to vector<8x128xf32>
    %22 = arith.addf %20, %21 : vector<8x128xf32>
    %23 = vector.extract_strided_slice %19 {offsets = [16, 0], sizes = [8, 128], strides = [1, 1]} : vector<64x128xf32> to vector<8x128xf32>
    %24 = arith.addf %22, %23 : vector<8x128xf32>
    %25 = vector.extract_strided_slice %19 {offsets = [24, 0], sizes = [8, 128], strides = [1, 1]} : vector<64x128xf32> to vector<8x128xf32>
    %26 = arith.addf %24, %25 : vector<8x128xf32>
    %27 = vector.extract_strided_slice %19 {offsets = [32, 0], sizes = [8, 128], strides = [1, 1]} : vector<64x128xf32> to vector<8x128xf32>
    %28 = arith.addf %26, %27 : vector<8x128xf32>
    %29 = vector.extract_strided_slice %19 {offsets = [40, 0], sizes = [8, 128], strides = [1, 1]} : vector<64x128xf32> to vector<8x128xf32>
    %30 = arith.addf %28, %29 : vector<8x128xf32>
    %31 = vector.extract_strided_slice %19 {offsets = [48, 0], sizes = [8, 128], strides = [1, 1]} : vector<64x128xf32> to vector<8x128xf32>
    %32 = arith.addf %30, %31 : vector<8x128xf32>
    %33 = vector.extract_strided_slice %19 {offsets = [56, 0], sizes = [8, 128], strides = [1, 1]} : vector<64x128xf32> to vector<8x128xf32>
    %34 = arith.addf %32, %33 : vector<8x128xf32>
    %cst_13 = arith.constant dense<0.000000e+00> : vector<128xf32>
    %35 = vector.multi_reduction <add>, %34, %cst_13 [0] : vector<8x128xf32> to vector<128xf32>
    %36 = vector.shape_cast %35 : vector<128xf32> to vector<1x128xf32>
    %c0_14 = arith.constant 0 : index
    %37 = memref.load %arg7[%c0_14] : memref<1xf32, #tpu.memory_space<smem>>
    %38 = vector.broadcast %37 : f32 to vector<1x128xf32>
    %39 = arith.addf %36, %38 : vector<1x128xf32>
    %c0_15 = arith.constant 0 : index
    %c0_16 = arith.constant 0 : index
    %40 = vector.load %arg8[%c0_15, %c0_16] : memref<1x128xf32, #tpu.memory_space<vmem>>, vector<1x128xf32>
    tpu.vector_store %arg8[%c0_15, %c0_16], %39 {strides = array<i32>} : memref<1x128xf32, #tpu.memory_space<vmem>>, vector<1x128xf32>,
    return
  }
  func.func @transform_0(%arg0: i32) -> (i32, i32) {
    %c0_i32 = arith.constant 0 : i32
    %c0_i32_0 = arith.constant 0 : i32
    return %c0_i32, %arg0 : i32, i32
  }
  func.func @transform_1(%arg0: i32) -> (i32, i32) {
    %c0_i32 = arith.constant 0 : i32
    %c0_i32_0 = arith.constant 0 : i32
    %c0_i32_1 = arith.constant 0 : i32
    return %c0_i32, %c0_i32_0 : i32, i32
  }
  func.func @transform_2(%arg0: i32) -> (i32, i32) {
    %c0_i32 = arith.constant 0 : i32
    %c0_i32_0 = arith.constant 0 : i32
    %c0_i32_1 = arith.constant 0 : i32
    return %c0_i32, %c0_i32_0 : i32, i32
  }
  func.func @transform_3(%arg0: i32) -> (i32, i32) {
    %c0_i32 = arith.constant 0 : i32
    %c0_i32_0 = arith.constant 0 : i32
    %c0_i32_1 = arith.constant 0 : i32
    return %c0_i32, %c0_i32_0 : i32, i32
  }
  func.func @transform_4(%arg0: i32) -> (i32, i32) {
    %c0_i32 = arith.constant 0 : i32
    %c0_i32_0 = arith.constant 0 : i32
    %c0_i32_1 = arith.constant 0 : i32
    return %c0_i32, %c0_i32_0 : i32, i32
  }
  func.func @transform_5(%arg0: i32) -> (i32, i32) {
    %c0_i32 = arith.constant 0 : i32
    %c0_i32_0 = arith.constant 0 : i32
    %c0_i32_1 = arith.constant 0 : i32
    return %c0_i32, %c0_i32_0 : i32, i32
  }
  func.func @transform_6(%arg0: i32) -> i32 {
    %c0_i32 = arith.constant 0 : i32
    %c0_i32_0 = arith.constant 0 : i32
    return %c0_i32 : i32
  }
  func.func @transform_7(%arg0: i32) -> (i32, i32) {
    %c0_i32 = arith.constant 0 : i32
    %c0_i32_0 = arith.constant 0 : i32
    return %c0_i32, %arg0 : i32, i32
  }
}

</mosaic_0001>

<llo_original>
// kernel: fcn_forward.1
$region0: #{fcn_forward.1}
  #allocation0 [shape = 'u32[]', space=smem, size = 0x4, offset = 0x4, fixed_abs, tag = 'smem constant byte address 0x4 - core index']
  #allocation1 [shape = 'u32[72,128]{1,0:T(1,128)}', space=vmem, size = 0x9000, scoped, tag = 'internal scratch']
  #allocation2 [shape = 'f32[1]{0:T(128)S(6)}', space=smem, size = 0x200, scoped, tag = 'scoped memory for fcn_forward.1']
  %s0 = inlined_call_operand.vmem [shape: f32[1,128], index: 0, kind: input, shape index: {}]
  %s1 = inlined_call_operand.vmem [shape: f32[64,1], index: 1, kind: input, shape index: {}]
  %s2 = inlined_call_operand.vmem [shape: f32[64,1], index: 2, kind: input, shape index: {}]
  %s3 = inlined_call_operand.vmem [shape: f32[64,64], index: 3, kind: input, shape index: {}]
  %s4 = inlined_call_operand.vmem [shape: f32[64,1], index: 4, kind: input, shape index: {}]
  %s5 = inlined_call_operand.vmem [shape: f32[64,1], index: 5, kind: input, shape index: {}]
  %s6 = inlined_call_operand.<no memory space> [shape: f32[1], index: 6, kind: input, shape index: {}]
  %s7 = inlined_call_operand.vmem [shape: f32[1,128], index: 7, kind: output, shape index: {}]
  %s8 = sld [smem:[#allocation0]]
  $region38: #{fcn_forward.1} parent=0
    _
  %s10 = ssub.s32 1, %s8
  %s11 = scalar_select 0, %s10, %s8
  %12 = sst [smem:[#allocation2]] %s6
  // Predicated region
  $region2: #{fcn_forward.1} parent=0 // pred_check
    _
  $region3: #{fcn_forward.1} parent=0 // pred_check_branch
    %14 = sbr.rel (0) target = $region5
  $region4: #{fcn_forward.1} parent=0 // pred_region
    _
  $region5: #{fcn_forward.1} parent=0 // pred_fallthru
    _
  // Predicated region
  $region6: #{fcn_forward.1} parent=0 // pred_check
    _
  $region7: #{fcn_forward.1} parent=0 // pred_check_branch
    %16 = sbr.rel (0) target = $region9
  $region8: #{fcn_forward.1} parent=0 // pred_region
    _
  $region9: #{fcn_forward.1} parent=0 // pred_fallthru
    _
  // Predicated region
  $region10: #{fcn_forward.1} parent=0 // pred_check
    _
  $region11: #{fcn_forward.1} parent=0 // pred_check_branch
    %18 = sbr.rel (0) target = $region13
  $region12: #{fcn_forward.1} parent=0 // pred_region
    _
  $region13: #{fcn_forward.1} parent=0 // pred_fallthru
    _
  // Predicated region
  $region14: #{fcn_forward.1} parent=0 // pred_check
    _
  $region15: #{fcn_forward.1} parent=0 // pred_check_branch
    %20 = sbr.rel (0) target = $region17
  $region16: #{fcn_forward.1} parent=0 // pred_region
    _
  $region17: #{fcn_forward.1} parent=0 // pred_fallthru
    _
  // Predicated region
  $region18: #{fcn_forward.1} parent=0 // pred_check
    _
  $region19: #{fcn_forward.1} parent=0 // pred_check_branch
    %22 = sbr.rel (0) target = $region21
  $region20: #{fcn_forward.1} parent=0 // pred_region
    _
  $region21: #{fcn_forward.1} parent=0 // pred_fallthru
    _
  // Predicated region
  $region22: #{fcn_forward.1} parent=0 // pred_check
    _
  $region23: #{fcn_forward.1} parent=0 // pred_check_branch
    %24 = sbr.rel (0) target = $region25
  $region24: #{fcn_forward.1} parent=0 // pred_region
    _
  $region25: #{fcn_forward.1} parent=0 // pred_fallthru
    _
  // Predicated region
  $region26: #{fcn_forward.1} parent=0 // pred_check
    _
  $region27: #{fcn_forward.1} parent=0 // pred_check_branch
    %26 = sbr.rel (0) target = $region29
  $region28: #{fcn_forward.1} parent=0 // pred_region
    _
  $region29: #{fcn_forward.1} parent=0 // pred_fallthru
    _
  %v27 = vld [vmem:[%s0] sm:$0x1]
  %v28 = vld [vmem:[%s1] sm:$0xff]
  %v29 = vld [vmem:[%s1 + $0x8] sm:$0xff]
  %v30 = vld [vmem:[%s1 + $0x10] sm:$0xff]
  %v31 = vld [vmem:[%s1 + $0x18] sm:$0xff]
  %v32 = vld [vmem:[%s1 + $0x20] sm:$0xff]
  %v33 = vld [vmem:[%s1 + $0x28] sm:$0xff]
  %v34 = vld [vmem:[%s1 + $0x30] sm:$0xff]
  %v35 = vld [vmem:[%s1 + $0x38] sm:$0xff]
  %37 = vset.pattern.permute.xlu0 0
  %38 = vperm.xlu0 %37, %v28
  %v39 = vpop.permute.xlu0 %38
  %42 = vset.pattern.permute.xlu0 0
  %43 = vperm.xlu0 %42, %v29
  %v44 = vpop.permute.xlu0 %43
  %47 = vset.pattern.permute.xlu0 0
  %48 = vperm.xlu0 %47, %v30
  %v49 = vpop.permute.xlu0 %48
  %52 = vset.pattern.permute.xlu0 0
  %53 = vperm.xlu0 %52, %v31
  %v54 = vpop.permute.xlu0 %53
  %57 = vset.pattern.permute.xlu0 0
  %58 = vperm.xlu0 %57, %v32
  %v59 = vpop.permute.xlu0 %58
  %62 = vset.pattern.permute.xlu0 0
  %63 = vperm.xlu0 %62, %v33
  %v64 = vpop.permute.xlu0 %63
  %67 = vset.pattern.permute.xlu0 0
  %68 = vperm.xlu0 %67, %v34
  %v69 = vpop.permute.xlu0 %68
  %72 = vset.pattern.permute.xlu0 0
  %73 = vperm.xlu0 %72, %v35
  %v74 = vpop.permute.xlu0 %73
  %v77 = vperm.slane %v27, 0
  %v79 = vmul.f32 %v39, %v77
  %v80 = vmul.f32 %v44, %v77
  %v81 = vmul.f32 %v49, %v77
  %v82 = vmul.f32 %v54, %v77
  %v83 = vmul.f32 %v59, %v77
  %v84 = vmul.f32 %v64, %v77
  %v85 = vmul.f32 %v69, %v77
  %v86 = vmul.f32 %v74, %v77
  %v87 = vld [vmem:[%s2] sm:$0xff]
  %v88 = vld [vmem:[%s2 + $0x8] sm:$0xff]
  %v89 = vld [vmem:[%s2 + $0x10] sm:$0xff]
  %v90 = vld [vmem:[%s2 + $0x18] sm:$0xff]
  %v91 = vld [vmem:[%s2 + $0x20] sm:$0xff]
  %v92 = vld [vmem:[%s2 + $0x28] sm:$0xff]
  %v93 = vld [vmem:[%s2 + $0x30] sm:$0xff]
  %v94 = vld [vmem:[%s2 + $0x38] sm:$0xff]
  %96 = vset.pattern.permute.xlu0 0
  %97 = vperm.xlu0 %96, %v87
  %v98 = vpop.permute.xlu0 %97
  %101 = vset.pattern.permute.xlu0 0
  %102 = vperm.xlu0 %101, %v88
  %v103 = vpop.permute.xlu0 %102
  %106 = vset.pattern.permute.xlu0 0
  %107 = vperm.xlu0 %106, %v89
  %v108 = vpop.permute.xlu0 %107
  %111 = vset.pattern.permute.xlu0 0
  %112 = vperm.xlu0 %111, %v90
  %v113 = vpop.permute.xlu0 %112
  %116 = vset.pattern.permute.xlu0 0
  %117 = vperm.xlu0 %116, %v91
  %v118 = vpop.permute.xlu0 %117
  %121 = vset.pattern.permute.xlu0 0
  %122 = vperm.xlu0 %121, %v92
  %v123 = vpop.permute.xlu0 %122
  %126 = vset.pattern.permute.xlu0 0
  %127 = vperm.xlu0 %126, %v93
  %v128 = vpop.permute.xlu0 %127
  %131 = vset.pattern.permute.xlu0 0
  %132 = vperm.xlu0 %131, %v94
  %v133 = vpop.permute.xlu0 %132
  %v135 = vadd.f32 %v79, %v98
  %v136 = vadd.f32 %v80, %v103
  %v137 = vadd.f32 %v81, %v108
  %v138 = vadd.f32 %v82, %v113
  %v139 = vadd.f32 %v83, %v118
  %v140 = vadd.f32 %v84, %v123
  %v141 = vadd.f32 %v85, %v128
  %v142 = vadd.f32 %v86, %v133
  %v143 = vmax.f32 %v135, 0.0
  %v144 = vmax.f32 %v136, 0.0
  %v145 = vmax.f32 %v137, 0.0
  %v146 = vmax.f32 %v138, 0.0
  %v147 = vmax.f32 %v139, 0.0
  %v148 = vmax.f32 %v140, 0.0
  %v149 = vmax.f32 %v141, 0.0
  %v150 = vmax.f32 %v142, 0.0
  %v151 = vld [vmem:[%s3] sm:$0xff]
  %v152 = vld [vmem:[%s3 + $0x8] sm:$0xff]
  %v153 = vld [vmem:[%s3 + $0x10] sm:$0xff]
  %v154 = vld [vmem:[%s3 + $0x18] sm:$0xff]
  %v155 = vld [vmem:[%s3 + $0x20] sm:$0xff]
  %v156 = vld [vmem:[%s3 + $0x28] sm:$0xff]
  %v157 = vld [vmem:[%s3 + $0x30] sm:$0xff]
  %v158 = vld [vmem:[%s3 + $0x38] sm:$0xff]
  %v159 = vld [vmem:[%s4] sm:$0xff]
  %v160 = vld [vmem:[%s4 + $0x8] sm:$0xff]
  %v161 = vld [vmem:[%s4 + $0x10] sm:$0xff]
  %v162 = vld [vmem:[%s4 + $0x18] sm:$0xff]
  %v163 = vld [vmem:[%s4 + $0x20] sm:$0xff]
  %v164 = vld [vmem:[%s4 + $0x28] sm:$0xff]
  %v165 = vld [vmem:[%s4 + $0x30] sm:$0xff]
  %v166 = vld [vmem:[%s4 + $0x38] sm:$0xff]
  %168 = vset.pattern.permute.xlu0 0
  %169 = vperm.xlu0 %168, %v159
  %v170 = vpop.permute.xlu0 %169
  %173 = vset.pattern.permute.xlu0 0
  %174 = vperm.xlu0 %173, %v160
  %v175 = vpop.permute.xlu0 %174
  %178 = vset.pattern.permute.xlu0 0
  %179 = vperm.xlu0 %178, %v161
  %v180 = vpop.permute.xlu0 %179
  %183 = vset.pattern.permute.xlu0 0
  %184 = vperm.xlu0 %183, %v162
  %v185 = vpop.permute.xlu0 %184
  %188 = vset.pattern.permute.xlu0 0
  %189 = vperm.xlu0 %188, %v163
  %v190 = vpop.permute.xlu0 %189
  %193 = vset.pattern.permute.xlu0 0
  %194 = vperm.xlu0 %193, %v164
  %v195 = vpop.permute.xlu0 %194
  %198 = vset.pattern.permute.xlu0 0
  %199 = vperm.xlu0 %198, %v165
  %v200 = vpop.permute.xlu0 %199
  %203 = vset.pattern.permute.xlu0 0
  %204 = vperm.xlu0 %203, %v166
  %v205 = vpop.permute.xlu0 %204
  %vm207 = vcmask 523264
  %v209 = vsel %vm207, %v151, 0
  %v212 = vsel %vm207, %v152, 0
  %v215 = vsel %vm207, %v153, 0
  %v218 = vsel %vm207, %v154, 0
  %v221 = vsel %vm207, %v155, 0
  %v224 = vsel %vm207, %v156, 0
  %v227 = vsel %vm207, %v157, 0
  %v230 = vsel %vm207, %v158, 0
  %232 = vmatpush.msra.mxu0 0.0
  %233 = vmatpush.msra.mxu0 0.0
  %234 = vmatpush.msra.mxu0 0.0
  %235 = vmatpush.msra.mxu0 0.0
  %236 = vmatpush.msra.mxu0 0.0
  %237 = vmatpush.msra.mxu0 0.0
  %238 = vmatpush.msra.mxu0 0.0
  %239 = vmatpush.msra.mxu0 0.0
  %240 = vmatpush.msra.mxu0 %v150
  %241 = vmatpush.msra.mxu0 %v149
  %242 = vmatpush.msra.mxu0 %v148
  %243 = vmatpush.msra.mxu0 %v147
  %244 = vmatpush.msra.mxu0 %v146
  %245 = vmatpush.msra.mxu0 %v145
  %246 = vmatpush.msra.mxu0 %v144
  %247 = vmatpush.msra.mxu0 %v143
  %248 = vmatmul.f32.gmra.mxu0 %v209
  %v249 = vpop.f32.mrf.mxu0
  %v250 = vadd.f32 %v170, %v249
  %251 = vmatmul.f32.gmra.mxu0 %v212
  %v252 = vpop.f32.mrf.mxu0
  %v253 = vadd.f32 %v175, %v252
  %254 = vmatmul.f32.gmra.mxu0 %v215
  %v255 = vpop.f32.mrf.mxu0
  %v256 = vadd.f32 %v180, %v255
  %257 = vmatmul.f32.gmra.mxu0 %v218
  %v258 = vpop.f32.mrf.mxu0
  %v259 = vadd.f32 %v185, %v258
  %260 = vmatmul.f32.gmra.mxu0 %v221
  %v261 = vpop.f32.mrf.mxu0
  %v262 = vadd.f32 %v190, %v261
  %263 = vmatmul.f32.gmra.mxu0 %v224
  %v264 = vpop.f32.mrf.mxu0
  %v265 = vadd.f32 %v195, %v264
  %266 = vmatmul.f32.gmra.mxu0 %v227
  %v267 = vpop.f32.mrf.mxu0
  %v268 = vadd.f32 %v200, %v267
  %269 = vmatmul.f32.gmra.mxu0 %v230
  %v270 = vpop.f32.mrf.mxu0
  %v271 = vadd.f32 %v205, %v270
  %272 = vdwg.mxu0
  %v273 = vmax.f32 %v250, 0.0
  %v274 = vmax.f32 %v253, 0.0
  %v275 = vmax.f32 %v256, 0.0
  %v276 = vmax.f32 %v259, 0.0
  %v277 = vmax.f32 %v262, 0.0
  %v278 = vmax.f32 %v265, 0.0
  %v279 = vmax.f32 %v268, 0.0
  %v280 = vmax.f32 %v271, 0.0
  %v281 = vld [vmem:[%s5] sm:$0xff]
  %v282 = vld [vmem:[%s5 + $0x8] sm:$0xff]
  %v283 = vld [vmem:[%s5 + $0x10] sm:$0xff]
  %v284 = vld [vmem:[%s5 + $0x18] sm:$0xff]
  %v285 = vld [vmem:[%s5 + $0x20] sm:$0xff]
  %v286 = vld [vmem:[%s5 + $0x28] sm:$0xff]
  %v287 = vld [vmem:[%s5 + $0x30] sm:$0xff]
  %v288 = vld [vmem:[%s5 + $0x38] sm:$0xff]
  %290 = vset.pattern.permute.xlu0 0
  %291 = vperm.xlu0 %290, %v281
  %v292 = vpop.permute.xlu0 %291
  %295 = vset.pattern.permute.xlu0 0
  %296 = vperm.xlu0 %295, %v282
  %v297 = vpop.permute.xlu0 %296
  %300 = vset.pattern.permute.xlu0 0
  %301 = vperm.xlu0 %300, %v283
  %v302 = vpop.permute.xlu0 %301
  %305 = vset.pattern.permute.xlu0 0
  %306 = vperm.xlu0 %305, %v284
  %v307 = vpop.permute.xlu0 %306
  %310 = vset.pattern.permute.xlu0 0
  %311 = vperm.xlu0 %310, %v285
  %v312 = vpop.permute.xlu0 %311
  %315 = vset.pattern.permute.xlu0 0
  %316 = vperm.xlu0 %315, %v286
  %v317 = vpop.permute.xlu0 %316
  %320 = vset.pattern.permute.xlu0 0
  %321 = vperm.xlu0 %320, %v287
  %v322 = vpop.permute.xlu0 %321
  %325 = vset.pattern.permute.xlu0 0
  %326 = vperm.xlu0 %325, %v288
  %v327 = vpop.permute.xlu0 %326
  %v329 = vmul.f32 %v273, %v292
  %v330 = vmul.f32 %v274, %v297
  %v331 = vmul.f32 %v275, %v302
  %v332 = vmul.f32 %v276, %v307
  %v333 = vmul.f32 %v277, %v312
  %v334 = vmul.f32 %v278, %v317
  %v335 = vmul.f32 %v279, %v322
  %v336 = vmul.f32 %v280, %v327
  %v337 = vadd.f32 %v329, %v330
  %v338 = vadd.f32 %v337, %v331
  %v339 = vadd.f32 %v338, %v332
  %v340 = vadd.f32 %v339, %v333
  %v341 = vadd.f32 %v340, %v334
  %v342 = vadd.f32 %v341, %v335
  %v343 = vadd.f32 %v342, %v336
  %v344 = vrot.slane %v343, 4
  %v345 = vadd.f32 %v343, %v344
  %v346 = vrot.slane %v345, 2
  %v347 = vadd.f32 %v345, %v346
  %v348 = vrot.slane %v347, 1
  %v349 = vadd.f32 %v347, %v348
  %s350 = sld [smem:[#allocation2]]
  %v351 = vstv %s350
  %v352 = vadd.f32 %v349, %v351
  %353 = vst [vmem:[%s7] sm:$0x1] %v352
  // Predicated region
  $region30: #{fcn_forward.1} parent=0 // pred_check
    _
  $region31: #{fcn_forward.1} parent=0 // pred_check_branch
    %355 = sbr.rel (0) target = $region33
  $region32: #{fcn_forward.1} parent=0 // pred_region
    _
  $region33: #{fcn_forward.1} parent=0 // pred_fallthru
    _
  // Predicated region
  $region34: #{fcn_forward.1} parent=0 // pred_check
    _
  $region35: #{fcn_forward.1} parent=0 // pred_check_branch
    %357 = sbr.rel (0) target = $region37
  $region36: #{fcn_forward.1} parent=0 // pred_region
    _
  $region37: #{fcn_forward.1} parent=0 // pred_fallthru
    _

</llo_original>
